<compile_context>
chip_gen: v7x
topology: tpu7x:2x2x1
jax: 0.10.0
libtpu: 0.0.40
codegen_flags: <defaults>
</compile_context>

<pallas_src>
import functools

import jax
import jax.numpy as jnp
from jax.experimental import pallas as pl
from jax.experimental.pallas import tpu as pltpu

_INV_SQRT2 = 0.7071067811865476


# ---------------------------------------------------------------------------
# Static capability / hardware queries (no kernel execution, no lowering).
# ---------------------------------------------------------------------------
def _check_single_buffer_support() -> bool:
    """True iff pl.BlockSpec accepts pipeline_mode=pl.Buffered(1)."""
    try:
        if not hasattr(pl, "Buffered"):
            return False
        pl.BlockSpec((8, 128), lambda i: (0, 0), pipeline_mode=pl.Buffered(1))
        return True
    except Exception:
        return False


_SINGLE_BUFFER_WEIGHTS = _check_single_buffer_support()


def _vmem_limit_bytes() -> int:
    """Per-generation VMEM budget: physical capacity minus compiler headroom."""
    cap = 64 * 2**20
    try:
        cap = int(getattr(pltpu.get_tpu_info(), "vmem_capacity_bytes", cap))
    except Exception:
        pass
    # 128 MiB chips (v5e/v6e) -> ~112 MiB; 64 MiB chips (v7x) -> ~52 MiB.
    return max(cap - max(cap // 8, 12 * 2**20), 32 * 2**20)


def _pick_tile(s: int, pref: int) -> int:
    """Largest tile <= pref that divides s and is a sublane multiple."""
    for t in (pref, 512, 256, 128, 64, 32, 16, 8):
        if t <= s and t <= pref and s % t == 0:
            return t
    return s  # small / odd s: use the full dimension (always a legal block)


# ---------------------------------------------------------------------------
# In-kernel math helpers (all statistics in f32).
# ---------------------------------------------------------------------------
def _layer_norm_f32(x_f32, gamma_f32, beta_f32, eps=1e-5):
    # x: (T, D) f32; gamma/beta: (1, D) f32.  Biased variance (nn.LayerNorm).
    mean = jnp.mean(x_f32, axis=-1, keepdims=True)
    xc = x_f32 - mean
    var = jnp.mean(xc * xc, axis=-1, keepdims=True)
    return xc * jax.lax.rsqrt(var + eps) * gamma_f32 + beta_f32


def _gelu_exact_f32(x):
    # nn.GELU() default (approximate='none'): x * Phi(x), Phi = 0.5*(1+erf(x/sqrt(2))).
    # Abramowitz & Stegun 7.1.26 rational erf (|err| < 1.5e-7); the 0.5 factor
    # is folded into the coefficients; the divide runs on the EUP (approx
    # reciprocal + one Newton step), off the VALU's critical slot.
    z = x * _INV_SQRT2
    az = jnp.abs(z)
    d = 1.0 + 0.3275911 * az
    t = pl.reciprocal(d, approx=True)
    t = t * (2.0 - d * t)                     # Newton step -> ~f32 accuracy
    b1, b2, b3, b4, b5 = (0.127414796, -0.142248368, 0.7107068705,
                          -0.7265760135, 0.5307027145)   # 0.5 * A&S coeffs
    half_e = (((((b5 * t + b4) * t + b3) * t + b2) * t + b1) * t) * jnp.exp(-z * z)
    phi = jnp.where(z >= 0.0, 1.0 - half_e, half_e)
    return x * phi


# ---------------------------------------------------------------------------
# Kernel 1: LN1 + fused QKV projection, emitting head-major Q/K/V.
# grid = (B, S // Ts), both parallel.
# ---------------------------------------------------------------------------
def _qkv_kernel(x_ref, g1_ref, b1_ref, wqkv_ref, bqkv_ref,
                q_ref, k_ref, v_ref, *, num_heads, head_dim, compute_dtype):
    cdt = compute_dtype
    H, hd = num_heads, head_dim
    Ts, D = x_ref.shape[1], x_ref.shape[2]

    x = x_ref[0].astype(jnp.float32)                                  # (Ts, D)
    h = _layer_norm_f32(x, g1_ref[...].astype(jnp.float32),
                        b1_ref[...].astype(jnp.float32))

    # One (Ts, D) @ (D, 3D) MXU matmul (weights packed host-side), f32 acc.
    qkv = jnp.dot(h.astype(cdt), wqkv_ref[...],
                  preferred_element_type=jnp.float32)
    qkv = (qkv + bqkv_ref[...].astype(jnp.float32)).astype(cdt)       # (Ts, 3D)

    # Head split done exactly once per token, here; kernel 2 consumes the
    # head-major layout directly (no per-KV-step transposes).
    def heads(mat):                                   # (Ts, D) -> (H, Ts, hd)
        return jnp.transpose(mat.reshape(Ts, H, hd), (1, 0, 2))

    q_ref[0] = heads(qkv[:, 0 * D:1 * D])
    k_ref[0] = heads(qkv[:, 1 * D:2 * D])
    v_ref[0] = heads(qkv[:, 2 * D:3 * D])


# ---------------------------------------------------------------------------
# Kernel 2: flash-style attention over KV tiles + out-proj + residual + LN2 +
# FFN (exact GELU) + residual.  grid = (B, S // Tq, S // Tkv);
# dimension_semantics = ("parallel", "parallel", "arbitrary").
# ---------------------------------------------------------------------------
def _attn_ffn_kernel(x_ref, q_ref, k_ref, v_ref,
                     wo_ref, bo_ref, g2_ref, b2_ref,
                     wu_ref, bu_ref, wd_ref, bd_ref,
                     o_ref,
                     m_scr, l_scr, acc_scr, *, compute_dtype):
    cdt = compute_dtype
    kv_idx = pl.program_id(2)
    n_kv = pl.num_programs(2)
    H, Tq, hd = q_ref.shape[1], q_ref.shape[2], q_ref.shape[3]
    D = H * hd

    @pl.when(kv_idx == 0)
    def _init():
        m_scr[...] = jnp.full(m_scr.shape, -jnp.inf, jnp.float32)
        l_scr[...] = jnp.zeros(l_scr.shape, jnp.float32)
        acc_scr[...] = jnp.zeros(acc_scr.shape, jnp.float32)

    q = q_ref[0]                                   # (H, Tq,  hd) compute dtype
    k = k_ref[0]                                   # (H, Tkv, hd)
    v = v_ref[0]                                   # (H, Tkv, hd)

    # NOTE: the reference Attention has no 1/sqrt(head_dim) scale and no mask.
    s = jnp.einsum('hqd,hkd->hqk', q, k,
                   preferred_element_type=jnp.float32)      # (H, Tq, Tkv) f32

    m_prev = m_scr[...]                                      # (H, Tq)
    m_new = jnp.maximum(m_prev, jnp.max(s, axis=-1))
    alpha = jnp.exp(m_prev - m_new)                          # (H, Tq)
    p = jnp.exp(s - m_new[:, :, None])                       # (H, Tq, Tkv) f32
    l_scr[...] = alpha * l_scr[...] + jnp.sum(p, axis=-1)
    acc_scr[...] = alpha[:, :, None] * acc_scr[...] + jnp.einsum(
        'hqk,hkd->hqd', p.astype(cdt), v, preferred_element_type=jnp.float32)
    m_scr[...] = m_new

    @pl.when(kv_idx == n_kv - 1)
    def _finalize():
        # EUP approximate reciprocal + one Newton step; normalization folded
        # in after the PV accumulation (scales (H,Tq,hd), not (H,Tq,Tkv)).
        l = l_scr[...]
        inv_l = pl.reciprocal(l, approx=True)
        inv_l = inv_l * (2.0 - l * inv_l)
        o_h = acc_scr[...] * inv_l[:, :, None]               # (H, Tq, hd) f32

        # Single (H,Tq,hd)->(Tq,D) relayout per q-tile (amortized over all KV
        # steps).  TODO(synk): fold into Wo via a host-reshaped (H, hd, D)
        # weight and a two-axis-contracting dot_general.
        attn = jnp.transpose(o_h, (1, 0, 2)).reshape(Tq, D)
        attn = jnp.dot(attn.astype(cdt), wo_ref[...],
                       preferred_element_type=jnp.float32)
        attn = attn + bo_ref[...].astype(jnp.float32)

        x1 = x_ref[0].astype(jnp.float32) + attn             # residual 1

        h2 = _layer_norm_f32(x1, g2_ref[...].astype(jnp.float32),
                             b2_ref[...].astype(jnp.float32))
        up = jnp.dot(h2.astype(cdt), wu_ref[...],
                     preferred_element_type=jnp.float32)
        up = _gelu_exact_f32(up + bu_ref[...].astype(jnp.float32)).astype(cdt)
        down = jnp.dot(up, wd_ref[...], preferred_element_type=jnp.float32)
        down = down + bd_ref[...].astype(jnp.float32)
        # Dropout: identity at inference.
        o_ref[0] = (x1 + down).astype(o_ref.dtype)           # residual 2


# ---------------------------------------------------------------------------
# pallas_call builders (cached on static shape/dtype/tiling parameters).
# ---------------------------------------------------------------------------
@functools.lru_cache(maxsize=None)
def _build_qkv_call(B, S, D, H, Ts, x_dtype_name, c_dtype_name, single_buf):
    x_dtype = jnp.dtype(x_dtype_name)
    cdt = jnp.dtype(c_dtype_name)
    hd = D // H

    def wspec(shape):
        idx = lambda *_, _n=len(shape): (0,) * _n     # grid-invariant block
        if single_buf:
            return pl.BlockSpec(shape, idx, pipeline_mode=pl.Buffered(1))
        return pl.BlockSpec(shape, idx)

    in_specs = [
        pl.BlockSpec((1, Ts, D), lambda b, i: (b, i, 0)),     # x tile
        wspec((1, D)), wspec((1, D)),                         # ln1 gamma/beta
        wspec((D, 3 * D)), wspec((1, 3 * D)),                 # packed Wqkv, bqkv
    ]
    head_spec = pl.BlockSpec((1, H, Ts, hd), lambda b, i: (b, 0, i, 0))
    out_specs = (head_spec, head_spec, head_spec)
    out_shape = tuple(jax.ShapeDtypeStruct((B, H, S, hd), cdt) for _ in range(3))

    x_bytes, c_bytes = x_dtype.itemsize, cdt.itemsize
    cost = pl.CostEstimate(
        flops=2 * B * S * D * 3 * D,
        transcendentals=0,
        bytes_accessed=B * S * D * x_bytes + 3 * B * S * D * c_bytes
                       + 3 * D * D * c_bytes + 5 * D * 4)

    kernel = functools.partial(_qkv_kernel, num_heads=H, head_dim=hd,
                               compute_dtype=cdt)
    return pl.pallas_call(
        kernel,
        out_shape=out_shape,
        grid_spec=pltpu.PrefetchScalarGridSpec(
            num_scalar_prefetch=0,
            grid=(B, S // Ts),
            in_specs=in_specs,
            out_specs=out_specs),
        compiler_params=pltpu.CompilerParams(
            dimension_semantics=("parallel", "parallel"),
            vmem_limit_bytes=_vmem_limit_bytes()),
        cost_estimate=cost)


@functools.lru_cache(maxsize=None)
def _build_attn_ffn_call(B, S, D, I, H, Tq, Tkv,
                         x_dtype_name, c_dtype_name, single_buf):
    x_dtype = jnp.dtype(x_dtype_name)
    cdt = jnp.dtype(c_dtype_name)
    hd = D // H

    def wspec(shape):
        idx = lambda *_, _n=len(shape): (0,) * _n     # grid-invariant block
        if single_buf:
            return pl.BlockSpec(shape, idx, pipeline_mode=pl.Buffered(1))
        return pl.BlockSpec(shape, idx)

    in_specs = [
        pl.BlockSpec((1, Tq, D), lambda b, i, k: (b, i, 0)),          # x tile
        pl.BlockSpec((1, H, Tq, hd), lambda b, i, k: (b, 0, i, 0)),   # Q tile
        pl.BlockSpec((1, H, Tkv, hd), lambda b, i, k: (b, 0, k, 0)),  # K tile
        pl.BlockSpec((1, H, Tkv, hd), lambda b, i, k: (b, 0, k, 0)),  # V tile
        wspec((D, D)), wspec((1, D)),                                 # Wo, bo
        wspec((1, D)), wspec((1, D)),                                 # ln2 gamma/beta
        wspec((D, I)), wspec((1, I)),                                 # W_up, b_up
        wspec((I, D)), wspec((1, D)),                                 # W_down, b_down
    ]
    out_specs = pl.BlockSpec((1, Tq, D), lambda b, i, k: (b, i, 0))
    scratch_shapes = [
        pltpu.VMEM((H, Tq), jnp.float32),        # running row max
        pltpu.VMEM((H, Tq), jnp.float32),        # running softmax denom
        pltpu.VMEM((H, Tq, hd), jnp.float32),    # output accumulator
    ]

    x_bytes, c_bytes = x_dtype.itemsize, cdt.itemsize
    cost = pl.CostEstimate(
        flops=2 * B * S * (D * D + 2 * D * I) + 4 * B * H * S * S * hd,
        transcendentals=B * H * S * S + B * S * I,
        bytes_accessed=(2 * B * S * D * x_bytes + 3 * B * S * D * c_bytes
                        + (D * D + 2 * D * I) * c_bytes))

    kernel = functools.partial(_attn_ffn_kernel, compute_dtype=cdt)
    return pl.pallas_call(
        kernel,
        out_shape=jax.ShapeDtypeStruct((B, S, D), x_dtype),
        grid_spec=pltpu.PrefetchScalarGridSpec(
            num_scalar_prefetch=0,
            grid=(B, S // Tq, S // Tkv),
            in_specs=in_specs,
            out_specs=out_specs,
            scratch_shapes=scratch_shapes),
        compiler_params=pltpu.CompilerParams(
            dimension_semantics=("parallel", "parallel", "arbitrary"),
            vmem_limit_bytes=_vmem_limit_bytes()),
        cost_estimate=cost)


# ---------------------------------------------------------------------------
# Wrapper.
# ---------------------------------------------------------------------------
def encoder_layer(x, params, *, num_heads, compute_dtype=jnp.bfloat16,
                  q_tile=256, kv_tile=512):
    B, S, D = x.shape
    I = params["w_up"].shape[1]
    assert D % num_heads == 0, "embed_dim must be divisible by num_heads"

    cdt = jnp.dtype(compute_dtype)
    f32 = jnp.float32

    # Host-side (constant-foldable under jit): pack the fused QKV projection
    # and cast all matmul weights to the MXU compute dtype once.  Biases and
    # LayerNorm parameters stay f32 (applied to f32 accumulators).
    wqkv = jnp.concatenate(
        [params["wq"], params["wk"], params["wv"]], axis=1).astype(cdt)
    bqkv = jnp.concatenate(
        [params["bq"], params["bk"], params["bv"]], axis=1).astype(f32)

    Ts = _pick_tile(S, q_tile)
    Tq = _pick_tile(S, q_tile)
    Tkv = _pick_tile(S, kv_tile)

    qkv_call = _build_qkv_call(B, S, D, num_heads, Ts,
                               jnp.dtype(x.dtype).name, cdt.name,
                               _SINGLE_BUFFER_WEIGHTS)
    q_hm, k_hm, v_hm = qkv_call(
        x, params["ln1_g"].astype(f32), params["ln1_b"].astype(f32), wqkv, bqkv)

    attn_ffn_call = _build_attn_ffn_call(B, S, D, I, num_heads, Tq, Tkv,
                                         jnp.dtype(x.dtype).name, cdt.name,
                                         _SINGLE_BUFFER_WEIGHTS)
    return attn_ffn_call(
        x, q_hm, k_hm, v_hm,
        params["wo"].astype(cdt), params["bo"].astype(f32),
        params["ln2_g"].astype(f32), params["ln2_b"].astype(f32),
        params["w_up"].astype(cdt), params["b_up"].astype(f32),
        params["w_down"].astype(cdt), params["b_down"].astype(f32))


# ---------------------------------------------------------------------------
# Pure-JAX reference (mirrors the PyTorch forward exactly) for verification.
# ---------------------------------------------------------------------------
def encoder_layer_ref(x, params, *, num_heads):
    D = x.shape[-1]
    head_dim = D // num_heads

    def ln(z, g, b, eps=1e-5):
        m = jnp.mean(z, axis=-1, keepdims=True)
        v = jnp.mean((z - m) ** 2, axis=-1, keepdims=True)
        return (z - m) / jnp.sqrt(v + eps) * g + b

    h = ln(x, params["ln1_g"], params["ln1_b"])
    q = h @ params["wq"] + params["bq"]
    k = h @ params["wk"] + params["bk"]
    v = h @ params["wv"] + params["bv"]
    outs = []
    for hi in range(num_heads):
        sl = slice(hi * head_dim, (hi + 1) * head_dim)
        s = jnp.einsum("bsd,btd->bst", q[..., sl], k[..., sl])
        w = jax.nn.softmax(s, axis=-1)
        outs.append(jnp.einsum("bst,btd->bsd", w, v[..., sl]))
    attn = jnp.concatenate(outs, axis=-1) @ params["wo"] + params["bo"]
    x1 = x + attn
    h2 = ln(x1, params["ln2_g"], params["ln2_b"])
    up = jax.nn.gelu(h2 @ params["w_up"] + params["b_up"], approximate=False)
    return x1 + (up @ params["w_down"] + params["b_down"])


# ---------------------------------------------------------------------------
if __name__ == "__main__":
    config = dict(hidden_size=32, num_attention_heads=4,
                  intermediate_size=64, hidden_dropout_prob=0.0)
    B, S = 2, 8
    D = config["hidden_size"]
    I = config["intermediate_size"]
    H = config["num_attention_heads"]

    key = jax.random.PRNGKey(0)
    keys = jax.random.split(key, 17)

    def w(k, shape, scale=0.02):
        return (scale * jax.random.normal(k, shape)).astype(jnp.float32)

    params = {
        "ln1_g": (1.0 + w(keys[7], (1, D))).astype(jnp.float32),
        "ln1_b": w(keys[8], (1, D)),
        "ln2_g": (1.0 + w(keys[9], (1, D))).astype(jnp.float32),
        "ln2_b": w(keys[10], (1, D)),
        "wq": w(keys[0], (D, D)), "bq": w(keys[11], (1, D)),
        "wk": w(keys[1], (D, D)), "bk": w(keys[12], (1, D)),
        "wv": w(keys[2], (D, D)), "bv": w(keys[13], (1, D)),
        "wo": w(keys[3], (D, D)), "bo": w(keys[14], (1, D)),
        "w_up": w(keys[4], (D, I)), "b_up": w(keys[15], (1, I)),
        "w_down": w(keys[5], (I, D)), "b_down": w(keys[16], (1, D)),
    }

    x = jax.random.normal(keys[6], (B, S, D), dtype=jnp.float32)
    ref = encoder_layer_ref(x, params, num_heads=H)

    # ---- f32 compute path: tight check --------------------------------------
    out_f32 = jax.block_until_ready(
        encoder_layer(x, params, num_heads=H, compute_dtype=jnp.float32))
    assert out_f32.shape == (B, S, D)
    err_f32 = float(jnp.max(jnp.abs(out_f32 - ref)))
    assert jnp.allclose(out_f32, ref, rtol=1e-3, atol=1e-3), err_f32

    # ---- default bf16-MXU compute path (f32 accumulation): loose check ------
    out_bf16 = jax.block_until_ready(
        encoder_layer(x, params, num_heads=H))          # compute_dtype=bfloat16
    assert out_bf16.shape == (B, S, D)
    err_bf16 = float(jnp.max(jnp.abs(out_bf16 - ref)))
    assert jnp.allclose(out_bf16, ref, rtol=5e-2, atol=5e-2), err_bf16

    print("KERNEL_OK")
</pallas_src>

<mosaic_0001>
module attributes {stable_mosaic.version = 11 : i64} {
  func.func @_qkv_kernel(%arg0: i32, %arg1: i32, %arg2: memref<1x8x32xf32, #tpu.memory_space<vmem>>, %arg3: memref<1x32xf32, #tpu.memory_space<vmem>>, %arg4: memref<1x32xf32, #tpu.memory_space<vmem>>, %arg5: memref<32x96xf32, #tpu.memory_space<vmem>>, %arg6: memref<1x96xf32, #tpu.memory_space<vmem>>, %arg7: memref<1x4x8x8xf32, #tpu.memory_space<vmem>>, %arg8: memref<1x4x8x8xf32, #tpu.memory_space<vmem>>, %arg9: memref<1x4x8x8xf32, #tpu.memory_space<vmem>>) attributes {dimension_semantics = [#tpu.dimension_semantics<parallel>, #tpu.dimension_semantics<parallel>], iteration_bounds = array<i64: 2, 1>, scalar_prefetch = 0 : i64, scratch_operands = 0 : i64, tpu.core_type = #tpu.core_type<tc>, window_params = [{transform_indices = @transform_0, window_bounds = array<i64: 1, 8, 32>}, {pipeline_mode = #tpu.pipeline_mode<synchronous>, transform_indices = @transform_1, window_bounds = array<i64: 1, 32>}, {pipeline_mode = #tpu.pipeline_mode<synchronous>, transform_indices = @transform_2, window_bounds = array<i64: 1, 32>}, {pipeline_mode = #tpu.pipeline_mode<synchronous>, transform_indices = @transform_3, window_bounds = array<i64: 32, 96>}, {pipeline_mode = #tpu.pipeline_mode<synchronous>, transform_indices = @transform_4, window_bounds = array<i64: 1, 96>}, {transform_indices = @transform_5, window_bounds = array<i64: 1, 4, 8, 8>}, {transform_indices = @transform_6, window_bounds = array<i64: 1, 4, 8, 8>}, {transform_indices = @transform_7, window_bounds = array<i64: 1, 4, 8, 8>}]} {
    %c0 = arith.constant 0 : index
    %c0_0 = arith.constant 0 : index
    %c0_1 = arith.constant 0 : index
    %0 = vector.load %arg2[%c0, %c0_0, %c0_1] : memref<1x8x32xf32, #tpu.memory_space<vmem>>, vector<1x8x32xf32>
    %1 = vector.shape_cast %0 : vector<1x8x32xf32> to vector<8x32xf32>
    %c0_2 = arith.constant 0 : index
    %c0_3 = arith.constant 0 : index
    %2 = vector.load %arg3[%c0_2, %c0_3] : memref<1x32xf32, #tpu.memory_space<vmem>>, vector<1x32xf32>
    %c0_4 = arith.constant 0 : index
    %c0_5 = arith.constant 0 : index
    %3 = vector.load %arg4[%c0_4, %c0_5] : memref<1x32xf32, #tpu.memory_space<vmem>>, vector<1x32xf32>
    %cst = arith.constant dense<0.000000e+00> : vector<8xf32>
    %4 = vector.multi_reduction <add>, %1, %cst [1] : vector<8x32xf32> to vector<8xf32>
    %5 = vector.shape_cast %4 : vector<8xf32> to vector<8x1xf32>
    %cst_6 = arith.constant 3.200000e+01 : f32
    %6 = vector.broadcast %cst_6 : f32 to vector<8x1xf32>
    %7 = arith.divf %5, %6 : vector<8x1xf32>
    %8 = vector.broadcast %7 : vector<8x1xf32> to vector<8x32xf32>
    %9 = arith.subf %1, %8 : vector<8x32xf32>
    %10 = arith.mulf %9, %9 : vector<8x32xf32>
    %cst_7 = arith.constant dense<0.000000e+00> : vector<8xf32>
    %11 = vector.multi_reduction <add>, %10, %cst_7 [1] : vector<8x32xf32> to vector<8xf32>
    %12 = vector.shape_cast %11 : vector<8xf32> to vector<8x1xf32>
    %cst_8 = arith.constant 3.200000e+01 : f32
    %13 = vector.broadcast %cst_8 : f32 to vector<8x1xf32>
    %14 = arith.divf %12, %13 : vector<8x1xf32>
    %cst_9 = arith.constant 9.99999974E-6 : f32
    %15 = vector.broadcast %cst_9 : f32 to vector<8x1xf32>
    %16 = arith.addf %14, %15 : vector<8x1xf32>
    %17 = math.rsqrt %16 : vector<8x1xf32>
    %18 = vector.broadcast %17 : vector<8x1xf32> to vector<8x32xf32>
    %19 = arith.mulf %9, %18 : vector<8x32xf32>
    %20 = vector.broadcast %2 : vector<1x32xf32> to vector<8x32xf32>
    %21 = arith.mulf %19, %20 : vector<8x32xf32>
    %22 = vector.broadcast %3 : vector<1x32xf32> to vector<8x32xf32>
    %23 = arith.addf %21, %22 : vector<8x32xf32>
    %c0_10 = arith.constant 0 : index
    %c0_11 = arith.constant 0 : index
    %24 = vector.load %arg5[%c0_10, %c0_11] : memref<32x96xf32, #tpu.memory_space<vmem>>, vector<32x96xf32>
    %cst_12 = arith.constant dense<0.000000e+00> : vector<8x96xf32>
    %25 = tpu.matmul %23, %24, %cst_12 {dimension_numbers = #tpu.dot_dimension_numbers<[1], [0], [0], [1], [0, 0, 1, 1], [], []>} : vector<8x32xf32>, vector<32x96xf32>, vector<8x96xf32> -> vector<8x96xf32>
    %c0_13 = arith.constant 0 : index
    %c0_14 = arith.constant 0 : index
    %26 = vector.load %arg6[%c0_13, %c0_14] : memref<1x96xf32, #tpu.memory_space<vmem>>, vector<1x96xf32>
    %27 = vector.broadcast %26 : vector<1x96xf32> to vector<8x96xf32>
    %28 = arith.addf %25, %27 : vector<8x96xf32>
    %29 = vector.extract_strided_slice %28 {offsets = [0, 0], sizes = [8, 32], strides = [1, 1]} : vector<8x96xf32> to vector<8x32xf32>
    %30 = vector.shape_cast %29 : vector<8x32xf32> to vector<8x4x8xf32>
    %31 = tpu.transpose %30, [1, 0, 2] : vector<8x4x8xf32> -> vector<4x8x8xf32>
    %c0_15 = arith.constant 0 : index
    %c0_16 = arith.constant 0 : index
    %c0_17 = arith.constant 0 : index
    %c0_18 = arith.constant 0 : index
    %32 = vector.load %arg7[%c0_15, %c0_16, %c0_17, %c0_18] : memref<1x4x8x8xf32, #tpu.memory_space<vmem>>, vector<1x4x8x8xf32>
    %33 = vector.shape_cast %32 : vector<1x4x8x8xf32> to vector<4x8x8xf32>
    %34 = vector.shape_cast %31 : vector<4x8x8xf32> to vector<1x4x8x8xf32>
    tpu.vector_store %arg7[%c0_15, %c0_16, %c0_17, %c0_18], %34 {strides = array<i32>} : memref<1x4x8x8xf32, #tpu.memory_space<vmem>>, vector<1x4x8x8xf32>,
    %35 = vector.extract_strided_slice %28 {offsets = [0, 32], sizes = [8, 32], strides = [1, 1]} : vector<8x96xf32> to vector<8x32xf32>
    %36 = vector.shape_cast %35 : vector<8x32xf32> to vector<8x4x8xf32>
    %37 = tpu.transpose %36, [1, 0, 2] : vector<8x4x8xf32> -> vector<4x8x8xf32>
    %c0_19 = arith.constant 0 : index
    %c0_20 = arith.constant 0 : index
    %c0_21 = arith.constant 0 : index
    %c0_22 = arith.constant 0 : index
    %38 = vector.load %arg8[%c0_19, %c0_20, %c0_21, %c0_22] : memref<1x4x8x8xf32, #tpu.memory_space<vmem>>, vector<1x4x8x8xf32>
    %39 = vector.shape_cast %38 : vector<1x4x8x8xf32> to vector<4x8x8xf32>
    %40 = vector.shape_cast %37 : vector<4x8x8xf32> to vector<1x4x8x8xf32>
    tpu.vector_store %arg8[%c0_19, %c0_20, %c0_21, %c0_22], %40 {strides = array<i32>} : memref<1x4x8x8xf32, #tpu.memory_space<vmem>>, vector<1x4x8x8xf32>,
    %41 = vector.extract_strided_slice %28 {offsets = [0, 64], sizes = [8, 32], strides = [1, 1]} : vector<8x96xf32> to vector<8x32xf32>
    %42 = vector.shape_cast %41 : vector<8x32xf32> to vector<8x4x8xf32>
    %43 = tpu.transpose %42, [1, 0, 2] : vector<8x4x8xf32> -> vector<4x8x8xf32>
    %c0_23 = arith.constant 0 : index
    %c0_24 = arith.constant 0 : index
    %c0_25 = arith.constant 0 : index
    %c0_26 = arith.constant 0 : index
    %44 = vector.load %arg9[%c0_23, %c0_24, %c0_25, %c0_26] : memref<1x4x8x8xf32, #tpu.memory_space<vmem>>, vector<1x4x8x8xf32>
    %45 = vector.shape_cast %44 : vector<1x4x8x8xf32> to vector<4x8x8xf32>
    %46 = vector.shape_cast %43 : vector<4x8x8xf32> to vector<1x4x8x8xf32>
    tpu.vector_store %arg9[%c0_23, %c0_24, %c0_25, %c0_26], %46 {strides = array<i32>} : memref<1x4x8x8xf32, #tpu.memory_space<vmem>>, vector<1x4x8x8xf32>,
    return
  }
  func.func @transform_0(%arg0: i32, %arg1: i32) -> (i32, i32, i32) {
    %c0_i32 = arith.constant 0 : i32
    %c0_i32_0 = arith.constant 0 : i32
    return %arg0, %arg1, %c0_i32 : i32, i32, i32
  }
  func.func @transform_1(%arg0: i32, %arg1: i32) -> (i32, i32) {
    %c0_i32 = arith.constant 0 : i32
    %c0_i32_0 = arith.constant 0 : i32
    %c0_i32_1 = arith.constant 0 : i32
    return %c0_i32, %c0_i32_0 : i32, i32
  }
  func.func @transform_2(%arg0: i32, %arg1: i32) -> (i32, i32) {
    %c0_i32 = arith.constant 0 : i32
    %c0_i32_0 = arith.constant 0 : i32
    %c0_i32_1 = arith.constant 0 : i32
    return %c0_i32, %c0_i32_0 : i32, i32
  }
  func.func @transform_3(%arg0: i32, %arg1: i32) -> (i32, i32) {
    %c0_i32 = arith.constant 0 : i32
    %c0_i32_0 = arith.constant 0 : i32
    %c0_i32_1 = arith.constant 0 : i32
    return %c0_i32, %c0_i32_0 : i32, i32
  }
  func.func @transform_4(%arg0: i32, %arg1: i32) -> (i32, i32) {
    %c0_i32 = arith.constant 0 : i32
    %c0_i32_0 = arith.constant 0 : i32
    %c0_i32_1 = arith.constant 0 : i32
    return %c0_i32, %c0_i32_0 : i32, i32
  }
  func.func @transform_5(%arg0: i32, %arg1: i32) -> (i32, i32, i32, i32) {
    %c0_i32 = arith.constant 0 : i32
    %c0_i32_0 = arith.constant 0 : i32
    %c0_i32_1 = arith.constant 0 : i32
    return %arg0, %c0_i32, %arg1, %c0_i32_0 : i32, i32, i32, i32
  }
  func.func @transform_6(%arg0: i32, %arg1: i32) -> (i32, i32, i32, i32) {
    %c0_i32 = arith.constant 0 : i32
    %c0_i32_0 = arith.constant 0 : i32
    %c0_i32_1 = arith.constant 0 : i32
    return %arg0, %c0_i32, %arg1, %c0_i32_0 : i32, i32, i32, i32
  }
  func.func @transform_7(%arg0: i32, %arg1: i32) -> (i32, i32, i32, i32) {
    %c0_i32 = arith.constant 0 : i32
    %c0_i32_0 = arith.constant 0 : i32
    %c0_i32_1 = arith.constant 0 : i32
    return %arg0, %c0_i32, %arg1, %c0_i32_0 : i32, i32, i32, i32
  }
}

</mosaic_0001>

<llo_original>
// kernel: tpu_custom_call.1
$region0: #{tpu_custom_call.1}
  #allocation0 [shape = 'u32[]', space=smem, size = 0x4, offset = 0x4, fixed_abs, tag = 'smem constant byte address 0x4 - core index']
  #allocation1 [shape = 'u32[144,128]{1,0:T(1,128)}', space=vmem, size = 0x12000, scoped, tag = 'internal scratch']
  %s0 = inlined_call_operand.hbm [shape: f32[2,8,32], index: 0, kind: input, shape index: {}]
  %s1 = inlined_call_operand.vmem [shape: f32[1,32], index: 1, kind: input, shape index: {}]
  %s2 = inlined_call_operand.vmem [shape: f32[1,32], index: 2, kind: input, shape index: {}]
  %s3 = inlined_call_operand.hbm [shape: f32[32,96], index: 3, kind: input, shape index: {}]
  %s4 = inlined_call_operand.vmem [shape: f32[1,96], index: 4, kind: input, shape index: {}]
  %s5 = inlined_call_operand.hbm [shape: f32[2,4,8,8], index: 5, kind: output, shape index: {0}]
  %s6 = inlined_call_operand.hbm [shape: f32[2,4,8,8], index: 6, kind: output, shape index: {1}]
  %s7 = inlined_call_operand.hbm [shape: f32[2,4,8,8], index: 7, kind: output, shape index: {2}]
  %8 = xla_tuple %s5, %s6, %s7
  %s9 = sld [smem:[#allocation0]]
  $region77: #{tpu_custom_call.1} parent=0
    _
  %s11 = ssub.s32 1, %s9
  %s12 = scalar_select 0, %s11, %s9
  $region1: #{tpu_custom_call.1} parent=0
    #allocation2 [shape = 'u8[8192]{0}', space=vmem, size = 0x2000, scoped, tag = 'input window, operand 0']
    #allocation3 [shape = 's32[2]{0}', space=sflag, size = 0x8, scoped, tag = 'scoped memory for tpu_custom_call.1']
    #allocation4 [shape = 's32[2]{0}', space=sflag, size = 0x8, scoped, tag = 'scoped memory for tpu_custom_call.1']
    #allocation5 [shape = 'u8[16384]{0}', space=vmem, size = 0x4000, scoped, tag = 'input window, operand 3, single buffered']
    #allocation6 [shape = 's32[1]{0}', space=sflag, size = 0x4, scoped, tag = 'scoped memory for tpu_custom_call.1']
    #allocation7 [shape = 'u8[32768]{0}', space=vmem, size = 0x8000, scoped, tag = 'output window, operand 0']
    #allocation8 [shape = 'u8[32768]{0}', space=vmem, size = 0x8000, scoped, tag = 'output window, operand 1']
    #allocation9 [shape = 's32[2]{0}', space=sflag, size = 0x8, scoped, tag = 'scoped memory for tpu_custom_call.1']
    #allocation10 [shape = 'u8[32768]{0}', space=vmem, size = 0x8000, scoped, tag = 'output window, operand 2']
    %13 = vsyncpa [#allocation3], 0
    %s14 = scalar_lea.sflag [#allocation3], 1
    %15 = vsyncpa %s14, 0
    %16 = vsyncpa [#allocation6], 0
    %17 = vsyncpa [#allocation4], 0
    %s18 = scalar_lea.sflag [#allocation4], 1
    %19 = vsyncpa %s18, 0
    %20 = vsyncpa [#allocation9], 0
    %s21 = scalar_lea.sflag [#allocation9], 1
    %22 = vsyncpa %s21, 0
    loop: start=0, step=1, limit=4
    $region2: #{tpu_custom_call.1} parent=1 // loop_pre_header
      _
    $region3: #{tpu_custom_call.1} parent=1 // loop_header
      %s24 = sphi 0, %s28
      %p25 = scmp.ge.s32.totalorder %s24, 4
      %s31 = sphi 0, %s43
      %s32 = sphi 0, %s39
      %s33 = sphi 0, %s31
      %s34 = sphi 0, %s32
      %s35 = sphi 0, %s33
      %s36 = sphi 0, %s34
      %s48 = sphi 0, %s50
      %s51 = sphi 0, %s48
      %s52 = sphi 0, %s51
      %s68 = sphi 0, %s52
      %s72 = sphi 0, %s72
      %s74 = sphi 0, %s72
      %s75 = sphi 0, %s74
      %s89 = sphi 0, %s75
      %s93 = sphi 0, %s93
      %s95 = sphi 0, %s93
      %s96 = sphi 0, %s95
      %s110 = sphi 0, %s96
      %s114 = sphi 0, %s114
      %s116 = sphi 0, %s114
      %s117 = sphi 0, %s116
      %s131 = sphi 0, %s117
      %s135 = sphi 0, %s135
      %s137 = sphi 0, %s135
      %s138 = sphi 0, %s137
      %s152 = sphi 0, %s138
      %s160 = sphi 0, %s162
      %s163 = sphi 0, %s160
      %s164 = sphi 0, %s163
      %s180 = sphi 0, %s164
      %s188 = sphi 0, %s190
      %s191 = sphi 0, %s188
      %s192 = sphi 0, %s191
      %s208 = sphi 0, %s192
      %s216 = sphi 0, %s218
      %s219 = sphi 0, %s216
      %s220 = sphi 0, %s219
      %s236 = sphi 0, %s220
    $region4: #{tpu_custom_call.1} parent=1 // loop_header_branch
      %27 = sbr.rel (%p25) target = $region8
    $region5: #{tpu_custom_call.1} parent=1 // loop_body
      %s29 = ssub.s32 %s24, 1
      %s30 = ssub.s32 %s24, 2
      %s37 = sadd.s32 1, %s32
      %p38 = scmp.ge.s32.totalorder %s37, 1
      %s39 = scalar_select %p38, 0, %s37
      %s40 = sadd.s32 1, %s31
      %s41 = scalar_select %p38, %s40, %s31
      %p42 = scmp.ge.s32.totalorder %s41, 2
      %s43 = scalar_select %p42, 0, %s41
      %s44 = ssub.s32 %s31, %s43
      %s45 = ssub.s32 %s32, %s39
      %s46 = sor.u32 %s44, %s45
      %p47 = scmp.eq.s32.totalorder %s46, 0
      %s49 = sadd.s32 %s48, 1
      %s50 = scalar_select %p47, %s48, %s49
      %p53 = pneg %p47
      %p54 = scmp.eq.s32.totalorder %s24, 1
      %p55 = por %p53, %p54
      %p56 = scmp.ne.s32.totalorder %s48, %s51
      %p57 = scmp.eq.s32.totalorder %s24, 0
      %p58 = por %p56, %p57
      %p59 = scmp.ne.s32.totalorder %s48, %s51
      %p60 = scmp.eq.s32.totalorder %s29, 1
      %p61 = por %p59, %p60
      %p62 = scmp.ne.s32.totalorder %s51, %s52
      %p63 = scmp.eq.s32.totalorder %s29, 0
      %p64 = por %p62, %p63
      %p65 = scmp.ne.s32.totalorder %s51, %s52
      %p66 = scmp.eq.s32.totalorder %s30, 1
      %p67 = por %p65, %p66
      %p69 = scmp.ne.s32.totalorder %s52, %s68
      %p70 = scmp.eq.s32.totalorder %s30, 0
      %p71 = por %p69, %p70
      %s73 = sadd.s32 %s72, 1
      %p76 = scmp.eq.s32.totalorder %s24, 1
      %p77 = scmp.ne.s32.totalorder %s72, %s74
      %p78 = scmp.eq.s32.totalorder %s24, 0
      %p79 = por %p77, %p78
      %p80 = scmp.ne.s32.totalorder %s72, %s74
      %p81 = scmp.eq.s32.totalorder %s29, 1
      %p82 = por %p80, %p81
      %p83 = scmp.ne.s32.totalorder %s74, %s75
      %p84 = scmp.eq.s32.totalorder %s29, 0
      %p85 = por %p83, %p84
      %p86 = scmp.ne.s32.totalorder %s74, %s75
      %p87 = scmp.eq.s32.totalorder %s30, 1
      %p88 = por %p86, %p87
      %p90 = scmp.ne.s32.totalorder %s75, %s89
      %p91 = scmp.eq.s32.totalorder %s30, 0
      %p92 = por %p90, %p91
      %s94 = sadd.s32 %s93, 1
      %p97 = scmp.eq.s32.totalorder %s24, 1
      %p98 = scmp.ne.s32.totalorder %s93, %s95
      %p99 = scmp.eq.s32.totalorder %s24, 0
      %p100 = por %p98, %p99
      %p101 = scmp.ne.s32.totalorder %s93, %s95
      %p102 = scmp.eq.s32.totalorder %s29, 1
      %p103 = por %p101, %p102
      %p104 = scmp.ne.s32.totalorder %s95, %s96
      %p105 = scmp.eq.s32.totalorder %s29, 0
      %p106 = por %p104, %p105
      %p107 = scmp.ne.s32.totalorder %s95, %s96
      %p108 = scmp.eq.s32.totalorder %s30, 1
      %p109 = por %p107, %p108
      %p111 = scmp.ne.s32.totalorder %s96, %s110
      %p112 = scmp.eq.s32.totalorder %s30, 0
      %p113 = por %p111, %p112
      %s115 = sadd.s32 %s114, 1
      %p118 = scmp.eq.s32.totalorder %s24, 1
      %p119 = scmp.ne.s32.totalorder %s114, %s116
      %p120 = scmp.eq.s32.totalorder %s24, 0
      %p121 = por %p119, %p120
      %p122 = scmp.ne.s32.totalorder %s114, %s116
      %p123 = scmp.eq.s32.totalorder %s29, 1
      %p124 = por %p122, %p123
      %p125 = scmp.ne.s32.totalorder %s116, %s117
      %p126 = scmp.eq.s32.totalorder %s29, 0
      %p127 = por %p125, %p126
      %p128 = scmp.ne.s32.totalorder %s116, %s117
      %p129 = scmp.eq.s32.totalorder %s30, 1
      %p130 = por %p128, %p129
      %p132 = scmp.ne.s32.totalorder %s117, %s131
      %p133 = scmp.eq.s32.totalorder %s30, 0
      %p134 = por %p132, %p133
      %s136 = sadd.s32 %s135, 1
      %p139 = scmp.eq.s32.totalorder %s24, 1
      %p140 = scmp.ne.s32.totalorder %s135, %s137
      %p141 = scmp.eq.s32.totalorder %s24, 0
      %p142 = por %p140, %p141
      %p143 = scmp.ne.s32.totalorder %s135, %s137
      %p144 = scmp.eq.s32.totalorder %s29, 1
      %p145 = por %p143, %p144
      %p146 = scmp.ne.s32.totalorder %s137, %s138
      %p147 = scmp.eq.s32.totalorder %s29, 0
      %p148 = por %p146, %p147
      %p149 = scmp.ne.s32.totalorder %s137, %s138
      %p150 = scmp.eq.s32.totalorder %s30, 1
      %p151 = por %p149, %p150
      %p153 = scmp.ne.s32.totalorder %s138, %s152
      %p154 = scmp.eq.s32.totalorder %s30, 0
      %p155 = por %p153, %p154
      %s156 = ssub.s32 %s31, %s43
      %s157 = ssub.s32 %s32, %s39
      %s158 = sor.u32 %s156, %s157
      %p159 = scmp.eq.s32.totalorder %s158, 0
      %s161 = sadd.s32 %s160, 1
      %s162 = scalar_select %p159, %s160, %s161
      %p165 = pneg %p159
      %p166 = scmp.eq.s32.totalorder %s24, 1
      %p167 = por %p165, %p166
      %p168 = scmp.ne.s32.totalorder %s160, %s163
      %p169 = scmp.eq.s32.totalorder %s24, 0
      %p170 = por %p168, %p169
      %p171 = scmp.ne.s32.totalorder %s160, %s163
      %p172 = scmp.eq.s32.totalorder %s29, 1
      %p173 = por %p171, %p172
      %p174 = scmp.ne.s32.totalorder %s163, %s164
      %p175 = scmp.eq.s32.totalorder %s29, 0
      %p176 = por %p174, %p175
      %p177 = scmp.ne.s32.totalorder %s163, %s164
      %p178 = scmp.eq.s32.totalorder %s30, 1
      %p179 = por %p177, %p178
      %p181 = scmp.ne.s32.totalorder %s164, %s180
      %p182 = scmp.eq.s32.totalorder %s30, 0
      %p183 = por %p181, %p182
      %s184 = ssub.s32 %s31, %s43
      %s185 = ssub.s32 %s32, %s39
      %s186 = sor.u32 %s184, %s185
      %p187 = scmp.eq.s32.totalorder %s186, 0
      %s189 = sadd.s32 %s188, 1
      %s190 = scalar_select %p187, %s188, %s189
      %p193 = pneg %p187
      %p194 = scmp.eq.s32.totalorder %s24, 1
      %p195 = por %p193, %p194
      %p196 = scmp.ne.s32.totalorder %s188, %s191
      %p197 = scmp.eq.s32.totalorder %s24, 0
      %p198 = por %p196, %p197
      %p199 = scmp.ne.s32.totalorder %s188, %s191
      %p200 = scmp.eq.s32.totalorder %s29, 1
      %p201 = por %p199, %p200
      %p202 = scmp.ne.s32.totalorder %s191, %s192
      %p203 = scmp.eq.s32.totalorder %s29, 0
      %p204 = por %p202, %p203
      %p205 = scmp.ne.s32.totalorder %s191, %s192
      %p206 = scmp.eq.s32.totalorder %s30, 1
      %p207 = por %p205, %p206
      %p209 = scmp.ne.s32.totalorder %s192, %s208
      %p210 = scmp.eq.s32.totalorder %s30, 0
      %p211 = por %p209, %p210
      %s212 = ssub.s32 %s31, %s43
      %s213 = ssub.s32 %s32, %s39
      %s214 = sor.u32 %s212, %s213
      %p215 = scmp.eq.s32.totalorder %s214, 0
      %s217 = sadd.s32 %s216, 1
      %s218 = scalar_select %p215, %s216, %s217
      %p221 = pneg %p215
      %p222 = scmp.eq.s32.totalorder %s24, 1
      %p223 = por %p221, %p222
      %p224 = scmp.ne.s32.totalorder %s216, %s219
      %p225 = scmp.eq.s32.totalorder %s24, 0
      %p226 = por %p224, %p225
      %p227 = scmp.ne.s32.totalorder %s216, %s219
      %p228 = scmp.eq.s32.totalorder %s29, 1
      %p229 = por %p227, %p228
      %p230 = scmp.ne.s32.totalorder %s219, %s220
      %p231 = scmp.eq.s32.totalorder %s29, 0
      %p232 = por %p230, %p231
      %p233 = scmp.ne.s32.totalorder %s219, %s220
      %p234 = scmp.eq.s32.totalorder %s30, 1
      %p235 = por %p233, %p234
      %p237 = scmp.ne.s32.totalorder %s220, %s236
      %p238 = scmp.eq.s32.totalorder %s30, 0
      %p239 = por %p237, %p238
      %p240 = scmp.le.s32.totalorder 1, %s24
      %p241 = scmp.lt.s32.totalorder %s24, 3
      %p242 = pnand %p240, %p241
      %p243 = pneg %p242
      // Predicated region
      $region9: #{tpu_custom_call.1} parent=5 // pred_check
        _
      $region10: #{tpu_custom_call.1} parent=5 // pred_check_branch
        %245 = sbr.rel (%p242) target = $region12
      $region11: #{tpu_custom_call.1} parent=5 // pred_region
        %s246 = ssub.s32 %s24, 1
        // Predicated region
        $region13: #{tpu_custom_call.1} parent=11 // pred_check
          %p247 = pneg %p85
        $region14: #{tpu_custom_call.1} parent=11 // pred_check_branch
          %249 = sbr.rel (%p247) target = $region16
        $region15: #{tpu_custom_call.1} parent=11 // pred_region
          _
        $region16: #{tpu_custom_call.1} parent=11 // pred_fallthru
          _
        // Predicated region
        $region17: #{tpu_custom_call.1} parent=11 // pred_check
          %p250 = pneg %p106
        $region18: #{tpu_custom_call.1} parent=11 // pred_check_branch
          %252 = sbr.rel (%p250) target = $region20
        $region19: #{tpu_custom_call.1} parent=11 // pred_region
          _
        $region20: #{tpu_custom_call.1} parent=11 // pred_fallthru
          _
        // Predicated region
        $region21: #{tpu_custom_call.1} parent=11 // pred_check
          %p253 = pneg %p127
        $region22: #{tpu_custom_call.1} parent=11 // pred_check_branch
          %255 = sbr.rel (%p253) target = $region24
        $region23: #{tpu_custom_call.1} parent=11 // pred_region
          %s257 = ssub.s32 512, 512
          %258 = vsyncadd [#allocation6], %s257
          %s259 = sshll.u32 [#allocation5], 4
          %s260 = int_to_ptr.vmem [resolvable:$true] %s259
          %265 = dma.hbm_to_vmem [thread:$0]  %s3, 512, %s260, [#allocation6], 128, 128, 8
        $region24: #{tpu_custom_call.1} parent=11 // pred_fallthru
          _
        // Predicated region
        $region25: #{tpu_custom_call.1} parent=11 // pred_check
          %p266 = pneg %p148
        $region26: #{tpu_custom_call.1} parent=11 // pred_check_branch
          %268 = sbr.rel (%p266) target = $region28
        $region27: #{tpu_custom_call.1} parent=11 // pred_region
          _
        $region28: #{tpu_custom_call.1} parent=11 // pred_fallthru
          _
      $region12: #{tpu_custom_call.1} parent=5 // pred_fallthru
        _
      %p269 = scmp.lt.s32.totalorder %s24, 2
      // Predicated region
      $region29: #{tpu_custom_call.1} parent=5 // pred_check
        %p270 = pneg %p269
      $region30: #{tpu_custom_call.1} parent=5 // pred_check_branch
        %272 = sbr.rel (%p270) target = $region32
      $region31: #{tpu_custom_call.1} parent=5 // pred_region
        // Predicated region
        $region33: #{tpu_custom_call.1} parent=31 // pred_check
          %p273 = pneg %p58
        $region34: #{tpu_custom_call.1} parent=31 // pred_check_branch
          %275 = sbr.rel (%p273) target = $region36
        $region35: #{tpu_custom_call.1} parent=31 // pred_region
          %s276 = sand.u32 %s48, 1
          %s277 = scalar_lea.sflag [#allocation3], %s276
          %s278 = sand.u32 %s48, 1
          %s279 = smul.addr %s278, 8
          %s280 = scalar_lea.vmem [#allocation2], %s279
          %s282 = ssub.s32 128, 128
          %283 = vsyncadd %s277, %s282
          %s284 = sadd.s32 %s32, %s31
          %s285 = smul.addr %s284, 128
          %s286 = scalar_lea.hbm %s0, %s285
          %s288 = sshll.u32 %s280, 4
          %s289 = int_to_ptr.vmem [resolvable:$true] %s288
          %291 = dma.hbm_to_vmem [thread:$0]  %s286, 128, %s289, %s277
        $region36: #{tpu_custom_call.1} parent=31 // pred_fallthru
          _
      $region32: #{tpu_custom_call.1} parent=5 // pred_fallthru
        _
      %p292 = scmp.le.s32.totalorder 1, %s24
      %p293 = scmp.lt.s32.totalorder %s24, 3
      %p294 = pnand %p292, %p293
      %p295 = pneg %p294
      // Predicated region
      $region37: #{tpu_custom_call.1} parent=5 // pred_check
        _
      $region38: #{tpu_custom_call.1} parent=5 // pred_check_branch
        %297 = sbr.rel (%p294) target = $region40
      $region39: #{tpu_custom_call.1} parent=5 // pred_region
        %s298 = ssub.s32 %s24, 1
        %s299 = sand.u32 %s51, 1
        %s300 = scalar_lea.sflag [#allocation3], %s299
        %s301 = sand.u32 %s51, 1
        %s302 = smul.addr %s301, 8
        %s303 = scalar_lea.vmem [#allocation2], %s302
        // Predicated region
        $region41: #{tpu_custom_call.1} parent=39 // pred_check
          %p304 = pneg %p64
        $region42: #{tpu_custom_call.1} parent=39 // pred_check_branch
          %306 = sbr.rel (%p304) target = $region44
        $region43: #{tpu_custom_call.1} parent=39 // pred_region
          %307 = dma.done %s300, 128
        $region44: #{tpu_custom_call.1} parent=39 // pred_fallthru
          _
        // Predicated region
        $region45: #{tpu_custom_call.1} parent=39 // pred_check
          %p308 = pneg %p127
        $region46: #{tpu_custom_call.1} parent=39 // pred_check_branch
          %310 = sbr.rel (%p308) target = $region48
        $region47: #{tpu_custom_call.1} parent=39 // pred_region
          %311 = dma.done [#allocation6], 512
        $region48: #{tpu_custom_call.1} parent=39 // pred_fallthru
          _
        %s312 = sand.u32 %s51, 1
        %s313 = scalar_lea.sflag [#allocation3], %s312
        %s314 = sand.u32 %s51, 1
        %s315 = smul.addr %s314, 8
        %s316 = scalar_lea.vmem [#allocation2], %s315
        %p317 = pneg %p64
        %p318 = pneg %p61
        %p319 = pneg %p85
        %p320 = pneg %p82
        %p321 = pneg %p106
        %p322 = pneg %p103
        %p323 = pneg %p127
        %p324 = pneg %p124
        %p325 = pneg %p148
        %p326 = pneg %p145
        %p327 = pneg %p176
        %p328 = pneg %p173
        %s329 = sand.u32 %s163, 1
        %s330 = scalar_lea.sflag [#allocation4], %s329
        %s331 = sand.u32 %s163, 1
        %s332 = smul.addr %s331, 32
        %s333 = scalar_lea.vmem [#allocation7], %s332
        %p334 = pneg %p204
        %p335 = pneg %p201
        %s336 = sand.u32 %s29, 1
        %s337 = scalar_lea.sflag [#allocation9], %s336
        %s338 = sand.u32 %s191, 1
        %s339 = smul.addr %s338, 32
        %s340 = scalar_lea.vmem [#allocation8], %s339
        %p341 = pneg %p232
        %p342 = pneg %p229
        %s343 = sand.u32 %s29, 1
        %s344 = scalar_lea.sflag [#allocation9], %s343
        %s345 = sand.u32 %s219, 1
        %s346 = smul.addr %s345, 32
        %s347 = scalar_lea.vmem [#allocation10], %s346
        %v348 = vld [vmem:[%s303] sm:$0xff]
        %v349 = vld [vmem:[%s1] sm:$0x1]
        %v350 = vld [vmem:[%s2] sm:$0x1]
        %vm351 = vcmask 261120
        %v352 = vsel %vm351, %v348, 0.0
        %353 = vadd.xlane.f32.xlu0 %v352
        %v354 = vpop.xlane.xlu0 %353
        %v355 = vrcp.pop 32.0
        %v356 = vmul.f32 %v354, %v355
        %v357 = vsub.f32 %v348, %v356
        %v358 = vmul.f32 %v357, %v357
        %v359 = vsel %vm351, %v358, 0.0
        %360 = vadd.xlane.f32.xlu0 %v359
        %v361 = vpop.xlane.xlu0 %360
        %v362 = vmul.f32 %v361, %v355
        %v363 = vadd.f32 %v362, 1e-05
        %v364 = vrsqrt.pop %v363
        %v365 = vmul.f32 %v357, %v364
        %v367 = vlaneseq
        %v368 = vshrl.u32 %v367, 7
        %v369 = vsub.s32 0, %v368
        %v370 = vrot.slane %v349, %v369
        %v372 = vmul.f32 %v365, %v370
        %v374 = vlaneseq
        %v375 = vshrl.u32 %v374, 7
        %v376 = vsub.s32 0, %v375
        %v377 = vrot.slane %v350, %v376
        %v379 = vadd.f32 %v372, %v377
        %v380 = vld [vmem:[#allocation5] sm:$0xff]
        %v381 = vld [vmem:[#allocation5 + $0x8] sm:$0xff]
        %v382 = vld [vmem:[#allocation5 + $0x10] sm:$0xff]
        %v383 = vld [vmem:[#allocation5 + $0x18] sm:$0xff]
        %v384 = vld [vmem:[%s4] sm:$0x1]
        %v386 = vlaneseq
        %v387 = vshrl.u32 %v386, 7
        %v388 = vsub.s32 0, %v387
        %v389 = vrot.slane %v384, %v388
        %v392 = vsel %vm351, %v379, 0
        %394 = vmatprep.subr.mxu0 0.0
        %395 = vmatpush1.msra.mxu0 %v380
        %396 = vmatprep.subr.mxu0 0.0
        %397 = vmatpush1.msra.mxu0 %v381
        %398 = vmatprep.subr.mxu0 0.0
        %399 = vmatpush1.msra.mxu0 %v382
        %400 = vmatprep.subr.mxu0 0.0
        %401 = vmatpush1.msra.mxu0 %v383
        %402 = vmatprep.subr.mxu0 0.0
        %403 = vmatpush1.msra.mxu0 0.0
        %404 = vmatprep.subr.mxu0 0.0
        %405 = vmatpush1.msra.mxu0 0.0
        %406 = vmatprep.subr.mxu0 0.0
        %407 = vmatpush1.msra.mxu0 0.0
        %408 = vmatprep.subr.mxu0 0.0
        %409 = vmatpush1.msra.mxu0 0.0
        %410 = vmatprep.subr.mxu0 0.0
        %411 = vmatpush1.msra.mxu0 0.0
        %412 = vmatprep.subr.mxu0 0.0
        %413 = vmatpush1.msra.mxu0 0.0
        %414 = vmatprep.subr.mxu0 0.0
        %415 = vmatpush1.msra.mxu0 0.0
        %416 = vmatprep.subr.mxu0 0.0
        %417 = vmatpush1.msra.mxu0 0.0
        %418 = vmatprep.subr.mxu0 0.0
        %419 = vmatpush1.msra.mxu0 0.0
        %420 = vmatprep.subr.mxu0 0.0
        %421 = vmatpush1.msra.mxu0 0.0
        %422 = vmatprep.subr.mxu0 0.0
        %423 = vmatpush1.msra.mxu0 0.0
        %424 = vmatprep.subr.mxu0 0.0
        %425 = vmatpush1.msra.mxu0 0.0
        %426 = vmatprep.subr.mxu0 0.0
        %427 = vmatpush1.msra.mxu0 0.0
        %428 = vmatprep.subr.mxu0 0.0
        %429 = vmatpush1.msra.mxu0 0.0
        %430 = vmatprep.subr.mxu0 0.0
        %431 = vmatpush1.msra.mxu0 0.0
        %432 = vmatprep.subr.mxu0 0.0
        %433 = vmatpush1.msra.mxu0 0.0
        %434 = vmatprep.subr.mxu0 0.0
        %435 = vmatpush1.msra.mxu0 0.0
        %436 = vmatprep.subr.mxu0 0.0
        %437 = vmatpush1.msra.mxu0 0.0
        %438 = vmatprep.subr.mxu0 0.0
        %439 = vmatpush1.msra.mxu0 0.0
        %440 = vmatprep.subr.mxu0 0.0
        %441 = vmatpush1.msra.mxu0 0.0
        %442 = vmatprep.subr.mxu0 0.0
        %443 = vmatpush1.msra.mxu0 0.0
        %444 = vmatprep.subr.mxu0 0.0
        %445 = vmatpush1.msra.mxu0 0.0
        %446 = vmatprep.subr.mxu0 0.0
        %447 = vmatpush1.msra.mxu0 0.0
        %448 = vmatprep.subr.mxu0 0.0
        %449 = vmatpush1.msra.mxu0 0.0
        %450 = vmatprep.subr.mxu0 0.0
        %451 = vmatpush1.msra.mxu0 0.0
        %452 = vmatprep.subr.mxu0 0.0
        %453 = vmatpush1.msra.mxu0 0.0
        %454 = vmatprep.subr.mxu0 0.0
        %455 = vmatpush1.msra.mxu0 0.0
        %456 = vmatprep.subr.mxu0 0.0
        %457 = vmatpush1.msra.mxu0 0.0
        %458 = vmatprep.mubr.f32.mxu0 0.0
        %459 = vmatmul.mubr.f32.gmra.mrb[0].mxu0 %v392
        %v460 = vpop.f32.mrb[0].mxu0
        %v461 = vadd.f32 %v389, %v460
        %v462 = vpop.f32.mrb[0].mxu0
        %463 = vdwg.mxu0
        %465 = vrot.lane.b32.xlu0 %v461, 120
        %v466 = vpop.permute.xlu0 %465
        %468 = vrot.lane.b32.xlu0 %v461, 112
        %v469 = vpop.permute.xlu0 %468
        %471 = vrot.lane.b32.xlu0 %v461, 104
        %v472 = vpop.permute.xlu0 %471
        %v474 = vcombine.low %v461, %v469
        %v475 = vcombine.high %v461, %v469
        %v477 = vunpack.c.l.s4 1983009808
        %v478 = vunpack.c.0.s8 %v477
        %v479 = vlaneseq
        %v480 = vshrl.u32 %v479, 7
        %v481 = vsub.s32 %v478, %v480
        %v482 = vrot.slane %v474, %v481
        %v484 = vunpack.c.l.s4 1983009808
        %v485 = vunpack.c.0.s8 %v484
        %v486 = vlaneseq
        %v487 = vshrl.u32 %v486, 7
        %v488 = vsub.s32 %v485, %v487
        %v489 = vrot.slane %v475, %v488
        %v490 = vcombine.low %v466, %v472
        %v491 = vcombine.high %v466, %v472
        %v493 = vunpack.c.l.s4 1983009808
        %v494 = vunpack.c.0.s8 %v493
        %v495 = vlaneseq
        %v496 = vshrl.u32 %v495, 7
        %v497 = vsub.s32 %v494, %v496
        %v498 = vrot.slane %v490, %v497
        %v500 = vunpack.c.l.s4 1983009808
        %v501 = vunpack.c.0.s8 %v500
        %v502 = vlaneseq
        %v503 = vshrl.u32 %v502, 7
        %v504 = vsub.s32 %v501, %v503
        %v505 = vrot.slane %v491, %v504
        %v506 = vcombine.low %v482, %v498
        %v507 = vcombine.high %v482, %v498
        %v509 = vunpack.c.l.s4 1934713408
        %v510 = vunpack.c.0.s8 %v509
        %v511 = vlaneseq
        %v512 = vshrl.u32 %v511, 7
        %v513 = vsub.s32 %v510, %v512
        %v514 = vrot.slane %v506, %v513
        %v516 = vunpack.c.l.s4 1934713408
        %v517 = vunpack.c.0.s8 %v516
        %v518 = vlaneseq
        %v519 = vshrl.u32 %v518, 7
        %v520 = vsub.s32 %v517, %v519
        %v521 = vrot.slane %v507, %v520
        %v522 = vcombine.low %v489, %v505
        %v523 = vcombine.high %v489, %v505
        %v525 = vunpack.c.l.s4 1934713408
        %v526 = vunpack.c.0.s8 %v525
        %v527 = vlaneseq
        %v528 = vshrl.u32 %v527, 7
        %v529 = vsub.s32 %v526, %v528
        %v530 = vrot.slane %v522, %v529
        %v532 = vunpack.c.l.s4 1934713408
        %v533 = vunpack.c.0.s8 %v532
        %v534 = vlaneseq
        %v535 = vshrl.u32 %v534, 7
        %v536 = vsub.s32 %v533, %v535
        %v537 = vrot.slane %v523, %v536
        %v538 = vcombine.high %v514, 0.0
        %v539 = vcombine.high %v521, 0.0
        %v540 = vcombine.high %v530, 0.0
        %v541 = vcombine.high %v537, 0.0
        %v542 = vcombine.low %v514, %v521
        %v544 = vunpack.c.l.s4 1983009808
        %v545 = vunpack.c.0.s8 %v544
        %v546 = vlaneseq
        %v547 = vshrl.u32 %v546, 7
        %v548 = vsub.s32 %v545, %v547
        %v549 = vrot.slane %v542, %v548
        %v550 = vcombine.low %v538, %v539
        %v552 = vunpack.c.l.s4 1983009808
        %v553 = vunpack.c.0.s8 %v552
        %v554 = vlaneseq
        %v555 = vshrl.u32 %v554, 7
        %v556 = vsub.s32 %v553, %v555
        %v557 = vrot.slane %v550, %v556
        %v558 = vcombine.low %v530, %v537
        %v560 = vunpack.c.l.s4 1983009808
        %v561 = vunpack.c.0.s8 %v560
        %v562 = vlaneseq
        %v563 = vshrl.u32 %v562, 7
        %v564 = vsub.s32 %v561, %v563
        %v565 = vrot.slane %v558, %v564
        %v566 = vcombine.low %v540, %v541
        %v568 = vunpack.c.l.s4 1983009808
        %v569 = vunpack.c.0.s8 %v568
        %v570 = vlaneseq
        %v571 = vshrl.u32 %v570, 7
        %v572 = vsub.s32 %v569, %v571
        %v573 = vrot.slane %v566, %v572
        %v574 = vcombine.low %v549, %v557
        %v575 = vcombine.high %v549, %v557
        %v577 = vunpack.c.l.s4 1934713408
        %v578 = vunpack.c.0.s8 %v577
        %v579 = vlaneseq
        %v580 = vshrl.u32 %v579, 7
        %v581 = vsub.s32 %v578, %v580
        %v582 = vrot.slane %v574, %v581
        %v584 = vunpack.c.l.s4 1934713408
        %v585 = vunpack.c.0.s8 %v584
        %v586 = vlaneseq
        %v587 = vshrl.u32 %v586, 7
        %v588 = vsub.s32 %v585, %v587
        %v589 = vrot.slane %v575, %v588
        %v590 = vcombine.low %v565, %v573
        %v591 = vcombine.high %v565, %v573
        %v593 = vunpack.c.l.s4 1934713408
        %v594 = vunpack.c.0.s8 %v593
        %v595 = vlaneseq
        %v596 = vshrl.u32 %v595, 7
        %v597 = vsub.s32 %v594, %v596
        %v598 = vrot.slane %v590, %v597
        %v600 = vunpack.c.l.s4 1934713408
        %v601 = vunpack.c.0.s8 %v600
        %v602 = vlaneseq
        %v603 = vshrl.u32 %v602, 7
        %v604 = vsub.s32 %v601, %v603
        %v605 = vrot.slane %v591, %v604
        %v606 = vcombine.low %v582, %v598
        %v607 = vcombine.high %v582, %v598
        %v608 = vcombine.low %v589, %v605
        %v609 = vcombine.high %v589, %v605
        %vm610 = vcmask 64512
        %611 = vst.msk [vmem:[%s333] sm:$0xff] %vm610, %v606
        %612 = vst.msk [vmem:[%s333 + $0x8] sm:$0xff] %vm610, %v607
        %613 = vst.msk [vmem:[%s333 + $0x10] sm:$0xff] %vm610, %v608
        %614 = vst.msk [vmem:[%s333 + $0x18] sm:$0xff] %vm610, %v609
        %615 = vrot.lane.b32.xlu0 %v461, 96
        %v616 = vpop.permute.xlu0 %615
        %617 = vrot.lane.b32.xlu0 %v466, 96
        %v618 = vpop.permute.xlu0 %617
        %619 = vrot.lane.b32.xlu0 %v469, 96
        %v620 = vpop.permute.xlu0 %619
        %621 = vrot.lane.b32.xlu0 %v472, 96
        %v622 = vpop.permute.xlu0 %621
        %v627 = vcombine.low %v616, %v620
        %v628 = vcombine.high %v616, %v620
        %v630 = vunpack.c.l.s4 1983009808
        %v631 = vunpack.c.0.s8 %v630
        %v632 = vlaneseq
        %v633 = vshrl.u32 %v632, 7
        %v634 = vsub.s32 %v631, %v633
        %v635 = vrot.slane %v627, %v634
        %v637 = vunpack.c.l.s4 1983009808
        %v638 = vunpack.c.0.s8 %v637
        %v639 = vlaneseq
        %v640 = vshrl.u32 %v639, 7
        %v641 = vsub.s32 %v638, %v640
        %v642 = vrot.slane %v628, %v641
        %v643 = vcombine.low %v618, %v622
        %v644 = vcombine.high %v618, %v622
        %v646 = vunpack.c.l.s4 1983009808
        %v647 = vunpack.c.0.s8 %v646
        %v648 = vlaneseq
        %v649 = vshrl.u32 %v648, 7
        %v650 = vsub.s32 %v647, %v649
        %v651 = vrot.slane %v643, %v650
        %v653 = vunpack.c.l.s4 1983009808
        %v654 = vunpack.c.0.s8 %v653
        %v655 = vlaneseq
        %v656 = vshrl.u32 %v655, 7
        %v657 = vsub.s32 %v654, %v656
        %v658 = vrot.slane %v644, %v657
        %v659 = vcombine.low %v635, %v651
        %v660 = vcombine.high %v635, %v651
        %v662 = vunpack.c.l.s4 1934713408
        %v663 = vunpack.c.0.s8 %v662
        %v664 = vlaneseq
        %v665 = vshrl.u32 %v664, 7
        %v666 = vsub.s32 %v663, %v665
        %v667 = vrot.slane %v659, %v666
        %v669 = vunpack.c.l.s4 1934713408
        %v670 = vunpack.c.0.s8 %v669
        %v671 = vlaneseq
        %v672 = vshrl.u32 %v671, 7
        %v673 = vsub.s32 %v670, %v672
        %v674 = vrot.slane %v660, %v673
        %v675 = vcombine.low %v642, %v658
        %v676 = vcombine.high %v642, %v658
        %v678 = vunpack.c.l.s4 1934713408
        %v679 = vunpack.c.0.s8 %v678
        %v680 = vlaneseq
        %v681 = vshrl.u32 %v680, 7
        %v682 = vsub.s32 %v679, %v681
        %v683 = vrot.slane %v675, %v682
        %v685 = vunpack.c.l.s4 1934713408
        %v686 = vunpack.c.0.s8 %v685
        %v687 = vlaneseq
        %v688 = vshrl.u32 %v687, 7
        %v689 = vsub.s32 %v686, %v688
        %v690 = vrot.slane %v676, %v689
        %v691 = vcombine.high %v667, 0.0
        %v692 = vcombine.high %v674, 0.0
        %v693 = vcombine.high %v683, 0.0
        %v694 = vcombine.high %v690, 0.0
        %v695 = vcombine.low %v667, %v674
        %v697 = vunpack.c.l.s4 1983009808
        %v698 = vunpack.c.0.s8 %v697
        %v699 = vlaneseq
        %v700 = vshrl.u32 %v699, 7
        %v701 = vsub.s32 %v698, %v700
        %v702 = vrot.slane %v695, %v701
        %v703 = vcombine.low %v691, %v692
        %v705 = vunpack.c.l.s4 1983009808
        %v706 = vunpack.c.0.s8 %v705
        %v707 = vlaneseq
        %v708 = vshrl.u32 %v707, 7
        %v709 = vsub.s32 %v706, %v708
        %v710 = vrot.slane %v703, %v709
        %v711 = vcombine.low %v683, %v690
        %v713 = vunpack.c.l.s4 1983009808
        %v714 = vunpack.c.0.s8 %v713
        %v715 = vlaneseq
        %v716 = vshrl.u32 %v715, 7
        %v717 = vsub.s32 %v714, %v716
        %v718 = vrot.slane %v711, %v717
        %v719 = vcombine.low %v693, %v694
        %v721 = vunpack.c.l.s4 1983009808
        %v722 = vunpack.c.0.s8 %v721
        %v723 = vlaneseq
        %v724 = vshrl.u32 %v723, 7
        %v725 = vsub.s32 %v722, %v724
        %v726 = vrot.slane %v719, %v725
        %v727 = vcombine.low %v702, %v710
        %v728 = vcombine.high %v702, %v710
        %v730 = vunpack.c.l.s4 1934713408
        %v731 = vunpack.c.0.s8 %v730
        %v732 = vlaneseq
        %v733 = vshrl.u32 %v732, 7
        %v734 = vsub.s32 %v731, %v733
        %v735 = vrot.slane %v727, %v734
        %v737 = vunpack.c.l.s4 1934713408
        %v738 = vunpack.c.0.s8 %v737
        %v739 = vlaneseq
        %v740 = vshrl.u32 %v739, 7
        %v741 = vsub.s32 %v738, %v740
        %v742 = vrot.slane %v728, %v741
        %v743 = vcombine.low %v718, %v726
        %v744 = vcombine.high %v718, %v726
        %v746 = vunpack.c.l.s4 1934713408
        %v747 = vunpack.c.0.s8 %v746
        %v748 = vlaneseq
        %v749 = vshrl.u32 %v748, 7
        %v750 = vsub.s32 %v747, %v749
        %v751 = vrot.slane %v743, %v750
        %v753 = vunpack.c.l.s4 1934713408
        %v754 = vunpack.c.0.s8 %v753
        %v755 = vlaneseq
        %v756 = vshrl.u32 %v755, 7
        %v757 = vsub.s32 %v754, %v756
        %v758 = vrot.slane %v744, %v757
        %v759 = vcombine.low %v735, %v751
        %v760 = vcombine.high %v735, %v751
        %v761 = vcombine.low %v742, %v758
        %v762 = vcombine.high %v742, %v758
        %763 = vst.msk [vmem:[%s340] sm:$0xff] %vm610, %v759
        %764 = vst.msk [vmem:[%s340 + $0x8] sm:$0xff] %vm610, %v760
        %765 = vst.msk [vmem:[%s340 + $0x10] sm:$0xff] %vm610, %v761
        %766 = vst.msk [vmem:[%s340 + $0x18] sm:$0xff] %vm610, %v762
        %767 = vrot.lane.b32.xlu0 %v461, 64
        %v768 = vpop.permute.xlu0 %767
        %769 = vrot.lane.b32.xlu0 %v466, 64
        %v770 = vpop.permute.xlu0 %769
        %771 = vrot.lane.b32.xlu0 %v469, 64
        %v772 = vpop.permute.xlu0 %771
        %773 = vrot.lane.b32.xlu0 %v472, 64
        %v774 = vpop.permute.xlu0 %773
        %v779 = vcombine.low %v768, %v772
        %v780 = vcombine.high %v768, %v772
        %v782 = vunpack.c.l.s4 1983009808
        %v783 = vunpack.c.0.s8 %v782
        %v784 = vlaneseq
        %v785 = vshrl.u32 %v784, 7
        %v786 = vsub.s32 %v783, %v785
        %v787 = vrot.slane %v779, %v786
        %v789 = vunpack.c.l.s4 1983009808
        %v790 = vunpack.c.0.s8 %v789
        %v791 = vlaneseq
        %v792 = vshrl.u32 %v791, 7
        %v793 = vsub.s32 %v790, %v792
        %v794 = vrot.slane %v780, %v793
        %v795 = vcombine.low %v770, %v774
        %v796 = vcombine.high %v770, %v774
        %v798 = vunpack.c.l.s4 1983009808
        %v799 = vunpack.c.0.s8 %v798
        %v800 = vlaneseq
        %v801 = vshrl.u32 %v800, 7
        %v802 = vsub.s32 %v799, %v801
        %v803 = vrot.slane %v795, %v802
        %v805 = vunpack.c.l.s4 1983009808
        %v806 = vunpack.c.0.s8 %v805
        %v807 = vlaneseq
        %v808 = vshrl.u32 %v807, 7
        %v809 = vsub.s32 %v806, %v808
        %v810 = vrot.slane %v796, %v809
        %v811 = vcombine.low %v787, %v803
        %v812 = vcombine.high %v787, %v803
        %v814 = vunpack.c.l.s4 1934713408
        %v815 = vunpack.c.0.s8 %v814
        %v816 = vlaneseq
        %v817 = vshrl.u32 %v816, 7
        %v818 = vsub.s32 %v815, %v817
        %v819 = vrot.slane %v811, %v818
        %v821 = vunpack.c.l.s4 1934713408
        %v822 = vunpack.c.0.s8 %v821
        %v823 = vlaneseq
        %v824 = vshrl.u32 %v823, 7
        %v825 = vsub.s32 %v822, %v824
        %v826 = vrot.slane %v812, %v825
        %v827 = vcombine.low %v794, %v810
        %v828 = vcombine.high %v794, %v810
        %v830 = vunpack.c.l.s4 1934713408
        %v831 = vunpack.c.0.s8 %v830
        %v832 = vlaneseq
        %v833 = vshrl.u32 %v832, 7
        %v834 = vsub.s32 %v831, %v833
        %v835 = vrot.slane %v827, %v834
        %v837 = vunpack.c.l.s4 1934713408
        %v838 = vunpack.c.0.s8 %v837
        %v839 = vlaneseq
        %v840 = vshrl.u32 %v839, 7
        %v841 = vsub.s32 %v838, %v840
        %v842 = vrot.slane %v828, %v841
        %v843 = vcombine.high %v819, 0.0
        %v844 = vcombine.high %v826, 0.0
        %v845 = vcombine.high %v835, 0.0
        %v846 = vcombine.high %v842, 0.0
        %v847 = vcombine.low %v819, %v826
        %v849 = vunpack.c.l.s4 1983009808
        %v850 = vunpack.c.0.s8 %v849
        %v851 = vlaneseq
        %v852 = vshrl.u32 %v851, 7
        %v853 = vsub.s32 %v850, %v852
        %v854 = vrot.slane %v847, %v853
        %v855 = vcombine.low %v843, %v844
        %v857 = vunpack.c.l.s4 1983009808
        %v858 = vunpack.c.0.s8 %v857
        %v859 = vlaneseq
        %v860 = vshrl.u32 %v859, 7
        %v861 = vsub.s32 %v858, %v860
        %v862 = vrot.slane %v855, %v861
        %v863 = vcombine.low %v835, %v842
        %v865 = vunpack.c.l.s4 1983009808
        %v866 = vunpack.c.0.s8 %v865
        %v867 = vlaneseq
        %v868 = vshrl.u32 %v867, 7
        %v869 = vsub.s32 %v866, %v868
        %v870 = vrot.slane %v863, %v869
        %v871 = vcombine.low %v845, %v846
        %v873 = vunpack.c.l.s4 1983009808
        %v874 = vunpack.c.0.s8 %v873
        %v875 = vlaneseq
        %v876 = vshrl.u32 %v875, 7
        %v877 = vsub.s32 %v874, %v876
        %v878 = vrot.slane %v871, %v877
        %v879 = vcombine.low %v854, %v862
        %v880 = vcombine.high %v854, %v862
        %v882 = vunpack.c.l.s4 1934713408
        %v883 = vunpack.c.0.s8 %v882
        %v884 = vlaneseq
        %v885 = vshrl.u32 %v884, 7
        %v886 = vsub.s32 %v883, %v885
        %v887 = vrot.slane %v879, %v886
        %v889 = vunpack.c.l.s4 1934713408
        %v890 = vunpack.c.0.s8 %v889
        %v891 = vlaneseq
        %v892 = vshrl.u32 %v891, 7
        %v893 = vsub.s32 %v890, %v892
        %v894 = vrot.slane %v880, %v893
        %v895 = vcombine.low %v870, %v878
        %v896 = vcombine.high %v870, %v878
        %v898 = vunpack.c.l.s4 1934713408
        %v899 = vunpack.c.0.s8 %v898
        %v900 = vlaneseq
        %v901 = vshrl.u32 %v900, 7
        %v902 = vsub.s32 %v899, %v901
        %v903 = vrot.slane %v895, %v902
        %v905 = vunpack.c.l.s4 1934713408
        %v906 = vunpack.c.0.s8 %v905
        %v907 = vlaneseq
        %v908 = vshrl.u32 %v907, 7
        %v909 = vsub.s32 %v906, %v908
        %v910 = vrot.slane %v896, %v909
        %v911 = vcombine.low %v887, %v903
        %v912 = vcombine.high %v887, %v903
        %v913 = vcombine.low %v894, %v910
        %v914 = vcombine.high %v894, %v910
        %915 = vst.msk [vmem:[%s347] sm:$0xff] %vm610, %v911
        %916 = vst.msk [vmem:[%s347 + $0x8] sm:$0xff] %vm610, %v912
        %917 = vst.msk [vmem:[%s347 + $0x10] sm:$0xff] %vm610, %v913
        %918 = vst.msk [vmem:[%s347 + $0x18] sm:$0xff] %vm610, %v914
        %s919 = sand.u32 %s163, 1
        %s920 = scalar_lea.sflag [#allocation4], %s919
        %s921 = sand.u32 %s163, 1
        %s922 = smul.addr %s921, 32
        %s923 = scalar_lea.vmem [#allocation7], %s922
        %s924 = sand.u32 %s29, 1
        %s925 = scalar_lea.sflag [#allocation9], %s924
        %s926 = sand.u32 %s191, 1
        %s927 = smul.addr %s926, 32
        %s928 = scalar_lea.vmem [#allocation8], %s927
        %s929 = sand.u32 %s29, 1
        %s930 = scalar_lea.sflag [#allocation9], %s929
        %s931 = sand.u32 %s219, 1
        %s932 = smul.addr %s931, 32
        %s933 = scalar_lea.vmem [#allocation10], %s932
        // Predicated region
        $region49: #{tpu_custom_call.1} parent=39 // pred_check
          %p934 = pneg %p173
        $region50: #{tpu_custom_call.1} parent=39 // pred_check_branch
          %936 = sbr.rel (%p934) target = $region52
        $region51: #{tpu_custom_call.1} parent=39 // pred_region
          %s938 = ssub.s32 512, 512
          %939 = vsyncadd %s920, %s938
          %s940 = smul.addr %s33, 4
          %s941 = sadd.s32 %s34, %s940
          %s942 = smul.addr %s941, 128
          %s943 = scalar_lea.hbm %s5, %s942
          %s944 = sshll.u32 %s923, 4
          %s945 = int_to_ptr.vmem [resolvable:$true] %s944
          %950 = dma.vmem_to_hbm [thread:$0]  %s945, 512, %s943, %s920, 128, 128, 8
        $region52: #{tpu_custom_call.1} parent=39 // pred_fallthru
          _
        // Predicated region
        $region53: #{tpu_custom_call.1} parent=39 // pred_check
          %p951 = pneg %p201
        $region54: #{tpu_custom_call.1} parent=39 // pred_check_branch
          %953 = sbr.rel (%p951) target = $region56
        $region55: #{tpu_custom_call.1} parent=39 // pred_region
          %s955 = ssub.s32 512, 512
          %956 = vsyncadd %s925, %s955
          %s957 = smul.addr %s33, 4
          %s958 = sadd.s32 %s34, %s957
          %s959 = smul.addr %s958, 128
          %s960 = scalar_lea.hbm %s6, %s959
          %s961 = sshll.u32 %s928, 4
          %s962 = int_to_ptr.vmem [resolvable:$true] %s961
          %967 = dma.vmem_to_hbm [thread:$0]  %s962, 512, %s960, %s925, 128, 128, 8
        $region56: #{tpu_custom_call.1} parent=39 // pred_fallthru
          _
        // Predicated region
        $region57: #{tpu_custom_call.1} parent=39 // pred_check
          %p968 = pneg %p229
        $region58: #{tpu_custom_call.1} parent=39 // pred_check_branch
          %970 = sbr.rel (%p968) target = $region60
        $region59: #{tpu_custom_call.1} parent=39 // pred_region
          %s972 = ssub.s32 512, 512
          %973 = vsyncadd %s930, %s972
          %s974 = smul.addr %s33, 4
          %s975 = sadd.s32 %s34, %s974
          %s976 = smul.addr %s975, 128
          %s977 = scalar_lea.hbm %s7, %s976
          %s978 = sshll.u32 %s933, 4
          %s979 = int_to_ptr.vmem [resolvable:$true] %s978
          %984 = dma.vmem_to_hbm [thread:$0]  %s979, 512, %s977, %s930, 128, 128, 8
        $region60: #{tpu_custom_call.1} parent=39 // pred_fallthru
          _
      $region40: #{tpu_custom_call.1} parent=5 // pred_fallthru
        _
      %p985 = scmp.le.s32.totalorder 2, %s24
      // Predicated region
      $region61: #{tpu_custom_call.1} parent=5 // pred_check
        %p986 = pneg %p985
      $region62: #{tpu_custom_call.1} parent=5 // pred_check_branch
        %988 = sbr.rel (%p986) target = $region64
      $region63: #{tpu_custom_call.1} parent=5 // pred_region
        %s989 = ssub.s32 %s24, 2
        // Predicated region
        $region65: #{tpu_custom_call.1} parent=63 // pred_check
          %p990 = pneg %p179
        $region66: #{tpu_custom_call.1} parent=63 // pred_check_branch
          %992 = sbr.rel (%p990) target = $region68
        $region67: #{tpu_custom_call.1} parent=63 // pred_region
          %s993 = sand.u32 %s164, 1
          %s994 = scalar_lea.sflag [#allocation4], %s993
          %s995 = sand.u32 %s164, 1
          %s996 = smul.addr %s995, 32
          %s997 = scalar_lea.vmem [#allocation7], %s996
          %998 = dma.done %s994, 512
        $region68: #{tpu_custom_call.1} parent=63 // pred_fallthru
          _
        // Predicated region
        $region69: #{tpu_custom_call.1} parent=63 // pred_check
          %p999 = pneg %p207
        $region70: #{tpu_custom_call.1} parent=63 // pred_check_branch
          %1001 = sbr.rel (%p999) target = $region72
        $region71: #{tpu_custom_call.1} parent=63 // pred_region
          %s1002 = sand.u32 %s30, 1
          %s1003 = scalar_lea.sflag [#allocation9], %s1002
          %s1004 = sand.u32 %s192, 1
          %s1005 = smul.addr %s1004, 32
          %s1006 = scalar_lea.vmem [#allocation8], %s1005
          %1007 = dma.done %s1003, 512
        $region72: #{tpu_custom_call.1} parent=63 // pred_fallthru
          _
        // Predicated region
        $region73: #{tpu_custom_call.1} parent=63 // pred_check
          %p1008 = pneg %p235
        $region74: #{tpu_custom_call.1} parent=63 // pred_check_branch
          %1010 = sbr.rel (%p1008) target = $region76
        $region75: #{tpu_custom_call.1} parent=63 // pred_region
          %s1011 = sand.u32 %s30, 1
          %s1012 = scalar_lea.sflag [#allocation9], %s1011
          %s1013 = sand.u32 %s220, 1
          %s1014 = smul.addr %s1013, 32
          %s1015 = scalar_lea.vmem [#allocation10], %s1014
          %1016 = dma.done %s1012, 512
        $region76: #{tpu_custom_call.1} parent=63 // pred_fallthru
          _
      $region64: #{tpu_custom_call.1} parent=5 // pred_fallthru
        _
    $region6: #{tpu_custom_call.1} parent=1 // loop_footer
      %s28 = sadd.s32 1, %s24
    $region7: #{tpu_custom_call.1} parent=1 // loop_footer_branch
      %23 = sbr.rel target = $region3
    $region8: #{tpu_custom_call.1} parent=1 // loop_exit
      _
    %1017 = vsyncpa [#allocation3], 1
    %s1018 = scalar_lea.sflag [#allocation3], 1
    %1019 = vsyncpa %s1018, 1
    %1020 = vsyncpa [#allocation6], 1
    %1021 = vsyncpa [#allocation4], 1
    %s1022 = scalar_lea.sflag [#allocation4], 1
    %1023 = vsyncpa %s1022, 1
    %1024 = vsyncpa [#allocation9], 1
    %s1025 = scalar_lea.sflag [#allocation9], 1
    %1026 = vsyncpa %s1025, 1

</llo_original>
